<compile_context>
chip_gen: v7x
topology: tpu7x:2x2x1
jax: 0.10.0
libtpu: 0.0.40
codegen_flags: <defaults>
</compile_context>

<pallas_src>
import jax
import jax.numpy as jnp
from jax import lax
from jax.experimental import pallas as pl
from jax.experimental.pallas import tpu as pltpu


_L_CHUNK_TARGET = 128   # conv-output rows processed per in-kernel matmul chunk


def _cdiv(a, b):
    return -(-a // b)


def _round_up(a, b):
    return _cdiv(a, b) * b


def _vmem_budget_and_limit():
    """Generation-aware (tile-sizing budget, vmem_limit_bytes)."""
    try:
        cap = int(pltpu.get_tpu_info().vmem_capacity_bytes)
    except Exception:
        cap = 0
    if cap >= 96 * 2**20:              # v5e / v6e: 128 MiB physical VMEM
        return 24 * 2**20, 64 * 2**20
    return 20 * 2**20, 32 * 2**20      # v7x (64 MiB per TC) or unknown


def _choose_batch_tile(batch, per_row, fixed, budget):
    avail = max(budget - fixed, per_row)
    tb = max(1, avail // per_row)
    if tb >= batch:
        if batch <= 8:
            return batch               # tiny batch: one tile covers it
        # keep the grid length >= 2 so both v7x TensorCores get work
        tb = min(tb, _round_up(_cdiv(batch, 2), 8))
    tb = max(8, min(int(tb), 1024))
    return (tb // 8) * 8               # sublane-aligned batch tile


def _make_kernel(K, Ep, Cp, Lc, NC, L_valid, time_mask):
    KEp = K * Ep

    def kernel(emb_ref, w_ref, b_ref, o_ref, col_ref, mx_ref):
        # emb_ref: (TB, Lp, Ep) bf16   w_ref: (K*Ep, Cp) bf16   b_ref: (1, Cp) f32
        # o_ref:   (TB, Cp)     f32    col_ref: (TB, Lp, K*Ep) bf16 scratch
        # mx_ref:  (TB, Cp)     f32 scratch (running max over time chunks)
        TB, Lp, _ = emb_ref.shape

        # ---- im2col into VMEM scratch: tap k -> lane block [k*Ep, (k+1)*Ep) ----
        # col[b, t, k*Ep + e] = emb[b, t - (K-1-k), e]  (0 where the index is < 0)
        for k in range(K):
            shift = K - 1 - k
            lo, hi = k * Ep, (k + 1) * Ep
            if shift >= Lp:
                col_ref[:, :, lo:hi] = jnp.zeros((TB, Lp, Ep), col_ref.dtype)
            elif shift == 0:
                col_ref[:, :, lo:hi] = emb_ref[...]
            else:
                col_ref[:, :shift, lo:hi] = jnp.zeros((TB, shift, Ep),
                                                      col_ref.dtype)
                col_ref[:, shift:, lo:hi] = emb_ref[:, :Lp - shift, :]

        # ---- chunked matmul + running max over time ----------------------------
        def chunk_max(c):
            start = c * Lc
            if not isinstance(start, int):
                start = pl.multiple_of(start, 8)
            x = col_ref[:, pl.ds(start, Lc), :].reshape(TB * Lc, KEp)
            y = jnp.dot(x, w_ref[...], preferred_element_type=jnp.float32)
            y = y.reshape(TB, Lc, Cp)
            if time_mask:
                t = start + lax.broadcasted_iota(jnp.int32, (1, Lc, 1), 1)
                y = jnp.where(t < L_valid, y, -jnp.inf)
            return jnp.max(y, axis=1)                        # (TB, Cp)

        if NC == 1:
            m = chunk_max(0)
        else:
            mx_ref[...] = jnp.full(mx_ref.shape, -jnp.inf, mx_ref.dtype)

            def body(c, carry):
                mx_ref[...] = jnp.maximum(mx_ref[...], chunk_max(c))
                return carry

            lax.fori_loop(0, NC, body, 0, unroll=(NC <= 8))
            m = mx_ref[...]

        # bias + ReLU AFTER the pool (exact: monotone, bias constant over time).
        o_ref[...] = jnp.maximum(m + b_ref[...], 0.0).astype(o_ref.dtype)

    return kernel


def cnn_subencoder_forward(ids, emb_table, conv_w, conv_b, kernel_size):
    """ids: [B, L] int32; emb_table: [V, E]; conv_w: [C, 1, K, E]; conv_b: [C]."""
    B, L = ids.shape
    E = emb_table.shape[1]
    C = conv_w.shape[0]                # out channels == emb_size
    K = int(kernel_size)

    Ep = _round_up(E, 128)             # lane-dense embedding / tap width
    Cp = _round_up(C, 128)             # lane-dense output channels

    # ---- plain-JAX glue ------------------------------------------------------
    # TODO(synk): for large B*L*E fuse the embedding gather into the kernel
    # (scalar-prefetched ids + manual DMA of rows from the HBM table).
    table = (emb_table if emb_table.dtype == jnp.bfloat16
             else emb_table.astype(jnp.bfloat16))
    if Ep != E:
        table = jnp.pad(table, ((0, 0), (0, Ep - E)))
    emb = jnp.take(table, ids, axis=0)                        # (B, L, Ep) bf16

    # conv weight -> flat im2col layout [k*Ep + e, c], zero-padded rows / lanes.
    w = jnp.transpose(conv_w[:, 0, :, :], (1, 2, 0))           # (K, E, C)
    w = jnp.pad(w, ((0, 0), (0, Ep - E), (0, Cp - C))).astype(jnp.bfloat16)
    w_flat = w.reshape(K * Ep, Cp)
    bias = jnp.pad(conv_b.astype(jnp.float32), (0, Cp - C)).reshape(1, Cp)

    # ---- time (L) padding: multiple of 8 and of the chunk length -------------
    Lp0 = _round_up(L, 8)
    NC = _cdiv(Lp0, _L_CHUNK_TARGET)
    Lc = _round_up(_cdiv(Lp0, NC), 8)
    Lp = Lc * NC
    time_mask = (Lp != L)

    # ---- batch tiling from a generation-aware VMEM budget ---------------------
    budget, vmem_limit = _vmem_budget_and_limit()
    fixed = K * Ep * Cp * 2 + Cp * 4 + (2 << 20)   # weight + bias + compiler slack
    per_row = (2 * Lp * Ep * 2        # emb tile (double-buffered)
               + Lp * K * Ep * 2      # im2col scratch
               + Lc * Cp * 4          # f32 activation chunk
               + Cp * 4               # running-max scratch
               + 2 * Cp * 4)          # pooled output (double-buffered)
    TB = _choose_batch_tile(B, per_row, fixed, budget)
    B_pad = _round_up(B, TB)

    if B_pad != B or Lp != L:
        emb = jnp.pad(emb, ((0, B_pad - B), (0, Lp - L), (0, 0)))

    kernel = _make_kernel(K=K, Ep=Ep, Cp=Cp, Lc=Lc, NC=NC,
                          L_valid=L, time_mask=time_mask)

    out = pl.pallas_call(
        kernel,
        out_shape=jax.ShapeDtypeStruct((B_pad, Cp), jnp.float32),
        grid_spec=pltpu.PrefetchScalarGridSpec(
            num_scalar_prefetch=0,
            grid=(B_pad // TB,),
            in_specs=[
                pl.BlockSpec((TB, Lp, Ep), lambda b: (b, 0, 0)),
                # constant block index across the grid -> one buffer is enough
                pl.BlockSpec((K * Ep, Cp), lambda b: (0, 0),
                             pipeline_mode=pl.Buffered(1)),
                pl.BlockSpec((1, Cp), lambda b: (0, 0),
                             pipeline_mode=pl.Buffered(1)),
            ],
            out_specs=pl.BlockSpec((TB, Cp), lambda b: (b, 0)),
            scratch_shapes=[
                pltpu.VMEM((TB, Lp, K * Ep), jnp.bfloat16),   # im2col
                pltpu.VMEM((TB, Cp), jnp.float32),            # running max
            ],
        ),
        compiler_params=pltpu.CompilerParams(
            dimension_semantics=("parallel",),
            vmem_limit_bytes=vmem_limit),
    )(emb, w_flat, bias)

    return out[:B, :C]


def reference_forward(ids, emb_table, conv_w, conv_b, kernel_size):
    """Pure-JAX f32 reference mirroring the PyTorch semantics."""
    K = int(kernel_size)
    emb = jnp.take(emb_table, ids, axis=0)                    # (B, L, E)
    B, L, E = emb.shape
    x = jnp.concatenate([jnp.zeros((B, K - 1, E), emb.dtype), emb], axis=1)
    x = x[:, None, :, :]                                      # NCHW
    y = lax.conv_general_dilated(
        x, conv_w, window_strides=(1, 1), padding="VALID",
        dimension_numbers=("NCHW", "OIHW", "NCHW"),
        precision=lax.Precision.HIGHEST)                      # (B, C, L, 1)
    y = y[:, :, :, 0] + conv_b[None, :, None]                 # (B, C, L)
    return jnp.max(jax.nn.relu(y), axis=2)                    # (B, C)


if __name__ == "__main__":
    def run_case(vocab, emb_size, kernel_size, batch, seq_len):
        key = jax.random.PRNGKey(0)
        k_ids, k_emb, k_w, k_b = jax.random.split(key, 4)
        ids = jax.random.randint(k_ids, (batch, seq_len), 0, vocab,
                                 dtype=jnp.int32)
        emb_table = jax.random.normal(k_emb, (vocab, emb_size), jnp.float32) * 0.1
        conv_w = jax.random.normal(
            k_w, (emb_size, 1, kernel_size, emb_size), jnp.float32) * 0.1
        conv_b = jax.random.normal(k_b, (emb_size,), jnp.float32) * 0.1

        out = cnn_subencoder_forward(ids, emb_table, conv_w, conv_b, kernel_size)
        out = jax.block_until_ready(out)
        assert out.shape == (batch, emb_size)

        # Tight check: reference fed the same bf16-rounded params (isolates
        # kernel correctness from the intentional bf16 input quantization).
        emb_q = emb_table.astype(jnp.bfloat16).astype(jnp.float32)
        w_q = conv_w.astype(jnp.bfloat16).astype(jnp.float32)
        ref_q = reference_forward(ids, emb_q, w_q, conv_b, kernel_size)
        assert jnp.allclose(out, ref_q, atol=2e-3, rtol=2e-3), \
            "mismatch vs bf16-rounded reference"

        # Loose check vs the full-f32 PyTorch-semantics reference.
        ref = reference_forward(ids, emb_table, conv_w, conv_b, kernel_size)
        assert jnp.allclose(out, ref, atol=5e-2, rtol=5e-2), \
            "mismatch vs f32 reference"

    # Small config (mirrors args.kernel_size / args.emb_size): single batch
    # tile, single L chunk.
    run_case(vocab=50, emb_size=32, kernel_size=3, batch=2, seq_len=8)
    # Slightly larger config exercising batch tiling (grid=2), the chunked
    # L loop (NC=2), time-padding mask, and E/C lane padding.
    run_case(vocab=97, emb_size=48, kernel_size=5, batch=24, seq_len=140)

    print("KERNEL_OK")
</pallas_src>

<mosaic_0001>
module attributes {stable_mosaic.version = 11 : i64} {
  func.func @kernel(%arg0: i32, %arg1: memref<2x8x128xbf16, #tpu.memory_space<vmem>>, %arg2: memref<384x128xbf16, #tpu.memory_space<vmem>>, %arg3: memref<1x128xf32, #tpu.memory_space<vmem>>, %arg4: memref<2x128xf32, #tpu.memory_space<vmem>>, %arg5: memref<2x8x384xbf16, #tpu.memory_space<vmem>>, %arg6: memref<2x128xf32, #tpu.memory_space<vmem>>) attributes {dimension_semantics = [#tpu.dimension_semantics<parallel>], iteration_bounds = array<i64: 1>, scalar_prefetch = 0 : i64, scratch_operands = 2 : i64, tpu.core_type = #tpu.core_type<tc>, window_params = [{transform_indices = @transform_0, window_bounds = array<i64: 2, 8, 128>}, {pipeline_mode = #tpu.pipeline_mode<synchronous>, transform_indices = @transform_1, window_bounds = array<i64: 384, 128>}, {pipeline_mode = #tpu.pipeline_mode<synchronous>, transform_indices = @transform_2, window_bounds = array<i64: 1, 128>}, {transform_indices = @transform_3, window_bounds = array<i64: 2, 128>}]} {
    %cst = arith.constant 0.000000e+00 : bf16
    %0 = vector.broadcast %cst : bf16 to vector<2x2x128xbf16>
    %c0 = arith.constant 0 : index
    %c0_0 = arith.constant 0 : index
    %c0_1 = arith.constant 0 : index
    %1 = vector.load %arg5[%c0, %c0_0, %c0_1] : memref<2x8x384xbf16, #tpu.memory_space<vmem>>, vector<2x2x128xbf16>
    tpu.vector_store %arg5[%c0, %c0_0, %c0_1], %0 {strides = array<i32>} : memref<2x8x384xbf16, #tpu.memory_space<vmem>>, vector<2x2x128xbf16>,
    %c0_2 = arith.constant 0 : index
    %c0_3 = arith.constant 0 : index
    %c0_4 = arith.constant 0 : index
    %2 = vector.load %arg1[%c0_2, %c0_3, %c0_4] : memref<2x8x128xbf16, #tpu.memory_space<vmem>>, vector<2x6x128xbf16>
    %c0_5 = arith.constant 0 : index
    %c2 = arith.constant 2 : index
    %c0_6 = arith.constant 0 : index
    %3 = vector.load %arg5[%c0_5, %c2, %c0_6] : memref<2x8x384xbf16, #tpu.memory_space<vmem>>, vector<2x6x128xbf16>
    tpu.vector_store %arg5[%c0_5, %c2, %c0_6], %2 {strides = array<i32>} : memref<2x8x384xbf16, #tpu.memory_space<vmem>>, vector<2x6x128xbf16>,
    %cst_7 = arith.constant 0.000000e+00 : bf16
    %4 = vector.broadcast %cst_7 : bf16 to vector<2x1x128xbf16>
    %c0_8 = arith.constant 0 : index
    %c0_9 = arith.constant 0 : index
    %c128 = arith.constant 128 : index
    %5 = vector.load %arg5[%c0_8, %c0_9, %c128] : memref<2x8x384xbf16, #tpu.memory_space<vmem>>, vector<2x1x128xbf16>
    tpu.vector_store %arg5[%c0_8, %c0_9, %c128], %4 {strides = array<i32>} : memref<2x8x384xbf16, #tpu.memory_space<vmem>>, vector<2x1x128xbf16>,
    %c0_10 = arith.constant 0 : index
    %c0_11 = arith.constant 0 : index
    %c0_12 = arith.constant 0 : index
    %6 = vector.load %arg1[%c0_10, %c0_11, %c0_12] : memref<2x8x128xbf16, #tpu.memory_space<vmem>>, vector<2x7x128xbf16>
    %c0_13 = arith.constant 0 : index
    %c1 = arith.constant 1 : index
    %c128_14 = arith.constant 128 : index
    %7 = vector.load %arg5[%c0_13, %c1, %c128_14] : memref<2x8x384xbf16, #tpu.memory_space<vmem>>, vector<2x7x128xbf16>
    tpu.vector_store %arg5[%c0_13, %c1, %c128_14], %6 {strides = array<i32>} : memref<2x8x384xbf16, #tpu.memory_space<vmem>>, vector<2x7x128xbf16>,
    %c0_15 = arith.constant 0 : index
    %c0_16 = arith.constant 0 : index
    %c0_17 = arith.constant 0 : index
    %8 = vector.load %arg1[%c0_15, %c0_16, %c0_17] : memref<2x8x128xbf16, #tpu.memory_space<vmem>>, vector<2x8x128xbf16>
    %c0_18 = arith.constant 0 : index
    %c0_19 = arith.constant 0 : index
    %c256 = arith.constant 256 : index
    %9 = vector.load %arg5[%c0_18, %c0_19, %c256] : memref<2x8x384xbf16, #tpu.memory_space<vmem>>, vector<2x8x128xbf16>
    tpu.vector_store %arg5[%c0_18, %c0_19, %c256], %8 {strides = array<i32>} : memref<2x8x384xbf16, #tpu.memory_space<vmem>>, vector<2x8x128xbf16>,
    %c0_20 = arith.constant 0 : index
    %c0_21 = arith.constant 0 : index
    %c0_22 = arith.constant 0 : index
    %10 = vector.load %arg5[%c0_20, %c0_21, %c0_22] : memref<2x8x384xbf16, #tpu.memory_space<vmem>>, vector<2x8x384xbf16>
    %11 = vector.shape_cast %10 : vector<2x8x384xbf16> to vector<16x384xbf16>
    %c0_23 = arith.constant 0 : index
    %c0_24 = arith.constant 0 : index
    %12 = vector.load %arg2[%c0_23, %c0_24] : memref<384x128xbf16, #tpu.memory_space<vmem>>, vector<384x128xbf16>
    %cst_25 = arith.constant dense<0.000000e+00> : vector<16x128xf32>
    %13 = tpu.matmul %11, %12, %cst_25 {dimension_numbers = #tpu.dot_dimension_numbers<[1], [0], [0], [1], [0, 0, 1, 1], [], []>} : vector<16x384xbf16>, vector<384x128xbf16>, vector<16x128xf32> -> vector<16x128xf32>
    %14 = vector.shape_cast %13 : vector<16x128xf32> to vector<2x8x128xf32>
    %cst_26 = arith.constant dense<0xFF800000> : vector<2x128xf32>
    %15 = vector.multi_reduction <maximumf>, %14, %cst_26 [1] : vector<2x8x128xf32> to vector<2x128xf32>
    %c0_27 = arith.constant 0 : index
    %c0_28 = arith.constant 0 : index
    %16 = vector.load %arg3[%c0_27, %c0_28] : memref<1x128xf32, #tpu.memory_space<vmem>>, vector<1x128xf32>
    %17 = vector.broadcast %16 : vector<1x128xf32> to vector<2x128xf32>
    %18 = arith.addf %15, %17 : vector<2x128xf32>
    %cst_29 = arith.constant 0.000000e+00 : f32
    %19 = vector.broadcast %cst_29 : f32 to vector<2x128xf32>
    %20 = arith.maximumf %18, %19 : vector<2x128xf32>
    %c0_30 = arith.constant 0 : index
    %c0_31 = arith.constant 0 : index
    %21 = vector.load %arg4[%c0_30, %c0_31] : memref<2x128xf32, #tpu.memory_space<vmem>>, vector<2x128xf32>
    tpu.vector_store %arg4[%c0_30, %c0_31], %20 {strides = array<i32>} : memref<2x128xf32, #tpu.memory_space<vmem>>, vector<2x128xf32>,
    return
  }
  func.func @transform_0(%arg0: i32) -> (i32, i32, i32) {
    %c0_i32 = arith.constant 0 : i32
    %c0_i32_0 = arith.constant 0 : i32
    %c0_i32_1 = arith.constant 0 : i32
    return %arg0, %c0_i32, %c0_i32_0 : i32, i32, i32
  }
  func.func @transform_1(%arg0: i32) -> (i32, i32) {
    %c0_i32 = arith.constant 0 : i32
    %c0_i32_0 = arith.constant 0 : i32
    %c0_i32_1 = arith.constant 0 : i32
    return %c0_i32, %c0_i32_0 : i32, i32
  }
  func.func @transform_2(%arg0: i32) -> (i32, i32) {
    %c0_i32 = arith.constant 0 : i32
    %c0_i32_0 = arith.constant 0 : i32
    %c0_i32_1 = arith.constant 0 : i32
    return %c0_i32, %c0_i32_0 : i32, i32
  }
  func.func @transform_3(%arg0: i32) -> (i32, i32) {
    %c0_i32 = arith.constant 0 : i32
    %c0_i32_0 = arith.constant 0 : i32
    return %arg0, %c0_i32 : i32, i32
  }
}

</mosaic_0001>

<llo_original>
// kernel: tpu_custom_call.1
$region0: #{tpu_custom_call.1}
  #allocation0 [shape = 'u32[]', space=smem, size = 0x4, offset = 0x4, fixed_abs, tag = 'smem constant byte address 0x4 - core index']
  #allocation1 [shape = 'u32[144,128]{1,0:T(1,128)}', space=vmem, size = 0x12000, scoped, tag = 'internal scratch']
  #allocation2 [shape = 'bf16[2,8,384]{2,1,0:T(8,128)(2,1)}', space=vmem, size = 0x3000, scoped, tag = 'scratch operand']
  #allocation3 [shape = 'f32[2,128]{1,0:T(2,128)}', space=vmem, size = 0x400, scoped, tag = 'scratch operand']
  %s0 = inlined_call_operand.hbm [shape: bf16[2,8,128], index: 0, kind: input, shape index: {}]
  %s1 = inlined_call_operand.hbm [shape: bf16[384,128], index: 1, kind: input, shape index: {}]
  %s2 = inlined_call_operand.vmem [shape: f32[1,128], index: 2, kind: input, shape index: {}]
  %s3 = inlined_call_operand.hbm [shape: f32[2,128], index: 3, kind: output, shape index: {}]
  %s4 = sld [smem:[#allocation0]]
  $region30: #{tpu_custom_call.1} parent=0
    _
  %s6 = ssub.s32 1, %s4
  %s7 = scalar_select 0, %s6, %s4
  $region1: #{tpu_custom_call.1} parent=0
    #allocation4 [shape = 'u8[4096]{0}', space=vmem, size = 0x1000, scoped, tag = 'input window, operand 0, single buffered']
    #allocation5 [shape = 's32[1]{0}', space=sflag, size = 0x4, scoped, tag = 'scoped memory for tpu_custom_call.1']
    #allocation6 [shape = 's32[1]{0}', space=sflag, size = 0x4, scoped, tag = 'scoped memory for tpu_custom_call.1']
    #allocation7 [shape = 'u8[98304]{0}', space=vmem, size = 0x18000, scoped, tag = 'input window, operand 1, single buffered']
    #allocation8 [shape = 's32[1]{0}', space=sflag, size = 0x4, scoped, tag = 'scoped memory for tpu_custom_call.1']
    #allocation9 [shape = 'u8[1024]{0}', space=vmem, size = 0x400, scoped, tag = 'output window, operand 0, single buffered']
    %8 = vsyncpa [#allocation5], 0
    %9 = vsyncpa [#allocation8], 0
    %10 = vsyncpa [#allocation6], 0
    // Predicated region
    $region2: #{tpu_custom_call.1} parent=1 // pred_check
      _
    $region3: #{tpu_custom_call.1} parent=1 // pred_check_branch
      %12 = sbr.rel (0) target = $region5
    $region4: #{tpu_custom_call.1} parent=1 // pred_region
      %s14 = ssub.s32 128, 128
      %15 = vsyncadd [#allocation5], %s14
      %s16 = sshll.u32 [#allocation4], 4
      %s17 = int_to_ptr.vmem [resolvable:$true] %s16
      %22 = dma.hbm_to_vmem [thread:$0]  %s0, 128, %s17, [#allocation5], 64, 64, 4
    $region5: #{tpu_custom_call.1} parent=1 // pred_fallthru
      _
    // Predicated region
    $region6: #{tpu_custom_call.1} parent=1 // pred_check
      _
    $region7: #{tpu_custom_call.1} parent=1 // pred_check_branch
      %24 = sbr.rel (0) target = $region9
    $region8: #{tpu_custom_call.1} parent=1 // pred_region
      %s26 = ssub.s32 3072, 3072
      %27 = vsyncadd [#allocation8], %s26
      %s28 = sshll.u32 [#allocation7], 4
      %s29 = int_to_ptr.vmem [resolvable:$true] %s28
      %34 = dma.hbm_to_vmem [thread:$0]  %s1, 3072, %s29, [#allocation8], 64, 64, 4
    $region9: #{tpu_custom_call.1} parent=1 // pred_fallthru
      _
    // Predicated region
    $region10: #{tpu_custom_call.1} parent=1 // pred_check
      _
    $region11: #{tpu_custom_call.1} parent=1 // pred_check_branch
      %36 = sbr.rel (0) target = $region13
    $region12: #{tpu_custom_call.1} parent=1 // pred_region
      _
    $region13: #{tpu_custom_call.1} parent=1 // pred_fallthru
      _
    // Predicated region
    $region14: #{tpu_custom_call.1} parent=1 // pred_check
      _
    $region15: #{tpu_custom_call.1} parent=1 // pred_check_branch
      %38 = sbr.rel (0) target = $region17
    $region16: #{tpu_custom_call.1} parent=1 // pred_region
      %39 = dma.done [#allocation5], 128
    $region17: #{tpu_custom_call.1} parent=1 // pred_fallthru
      _
    // Predicated region
    $region18: #{tpu_custom_call.1} parent=1 // pred_check
      _
    $region19: #{tpu_custom_call.1} parent=1 // pred_check_branch
      %41 = sbr.rel (0) target = $region21
    $region20: #{tpu_custom_call.1} parent=1 // pred_region
      %42 = dma.done [#allocation8], 3072
    $region21: #{tpu_custom_call.1} parent=1 // pred_fallthru
      _
    %44 = vst [vmem:[#allocation2] sm:$0x1] 0
    %45 = vst [vmem:[#allocation2 + $0xc] sm:$0x1] 0
    %v46 = vld [vmem:[#allocation4] sm:$0x7]
    %v47 = vld [vmem:[#allocation4 + $0x4] sm:$0x7]
    %v50 = vrot.slane %v46, 7
    %v51 = vrot.slane %v47, 7
    %54 = vst [vmem:[#allocation2] sm:$0xe] %v50
    %55 = vst [vmem:[#allocation2 + $0xc] sm:$0xe] %v51
    %vm56 = vcmask 1040384
    %vm57 = vsmask.f32 256
    %vm58 = vmand %vm56, %vm57
    %v59 = vld [vmem:[#allocation2 + $0x4] sm:$0x1]
    %v60 = vsel %vm58, 0, %v59
    %61 = vst [vmem:[#allocation2 + $0x4] sm:$0x1] %v60
    %v62 = vld [vmem:[#allocation2 + $0x10] sm:$0x1]
    %v63 = vsel %vm58, 0, %v62
    %64 = vst [vmem:[#allocation2 + $0x10] sm:$0x1] %v63
    %v65 = vld [vmem:[#allocation4] sm:$0xf]
    %v66 = vld [vmem:[#allocation4 + $0x4] sm:$0xf]
    %v68 = vshrl.u32 %v65, 16
    %v70 = vrot.slane %v68, 7
    %v71 = vshll.u32 %v65, 16
    %v73 = vor.u32 %v70, %v71
    %v75 = vshrl.u32 %v66, 16
    %v77 = vrot.slane %v75, 7
    %v78 = vshll.u32 %v66, 16
    %v80 = vor.u32 %v77, %v78
    %vm83 = vcmask 1043456
    %vm84 = vsmask.f32 7938
    %vm85 = vmand %vm83, %vm84
    %v86 = vld [vmem:[#allocation2 + $0x4] sm:$0xf]
    %v87 = vsel %vm85, %v73, %v86
    %88 = vst [vmem:[#allocation2 + $0x4] sm:$0xf] %v87
    %v89 = vld [vmem:[#allocation2 + $0x10] sm:$0xf]
    %v90 = vsel %vm85, %v80, %v89
    %91 = vst [vmem:[#allocation2 + $0x10] sm:$0xf] %v90
    %v92 = vld [vmem:[#allocation4] sm:$0xf]
    %v93 = vld [vmem:[#allocation4 + $0x4] sm:$0xf]
    %94 = vst [vmem:[#allocation2 + $0x8] sm:$0xf] %v92
    %95 = vst [vmem:[#allocation2 + $0x14] sm:$0xf] %v93
    %v96 = vld [vmem:[#allocation2] sm:$0xff]
    %v97 = vld [vmem:[#allocation2 + $0x8] sm:$0xf]
    %v98 = vld [vmem:[#allocation2 + $0xc] sm:$0xff]
    %v99 = vld [vmem:[#allocation2 + $0x14] sm:$0xf]
    %v100 = vld [vmem:[#allocation7] sm:$0xf]
    %v101 = vld [vmem:[#allocation7 + $0x4] sm:$0xf]
    %v102 = vld [vmem:[#allocation7 + $0x8] sm:$0xf]
    %v103 = vld [vmem:[#allocation7 + $0xc] sm:$0xf]
    %v104 = vld [vmem:[#allocation7 + $0x10] sm:$0xf]
    %v105 = vld [vmem:[#allocation7 + $0x14] sm:$0xf]
    %v106 = vld [vmem:[#allocation7 + $0x18] sm:$0xf]
    %v107 = vld [vmem:[#allocation7 + $0x1c] sm:$0xf]
    %v108 = vld [vmem:[#allocation7 + $0x20] sm:$0xf]
    %v109 = vld [vmem:[#allocation7 + $0x24] sm:$0xf]
    %v110 = vld [vmem:[#allocation7 + $0x28] sm:$0xf]
    %v111 = vld [vmem:[#allocation7 + $0x2c] sm:$0xf]
    %v112 = vld [vmem:[#allocation7 + $0x30] sm:$0xf]
    %v113 = vld [vmem:[#allocation7 + $0x34] sm:$0xf]
    %v114 = vld [vmem:[#allocation7 + $0x38] sm:$0xf]
    %v115 = vld [vmem:[#allocation7 + $0x3c] sm:$0xf]
    %v116 = vld [vmem:[#allocation7 + $0x40] sm:$0xf]
    %v117 = vld [vmem:[#allocation7 + $0x44] sm:$0xf]
    %v118 = vld [vmem:[#allocation7 + $0x48] sm:$0xf]
    %v119 = vld [vmem:[#allocation7 + $0x4c] sm:$0xf]
    %v120 = vld [vmem:[#allocation7 + $0x50] sm:$0xf]
    %v121 = vld [vmem:[#allocation7 + $0x54] sm:$0xf]
    %v122 = vld [vmem:[#allocation7 + $0x58] sm:$0xf]
    %v123 = vld [vmem:[#allocation7 + $0x5c] sm:$0xf]
    %v124 = vld [vmem:[#allocation7 + $0x60] sm:$0xf]
    %v125 = vld [vmem:[#allocation7 + $0x64] sm:$0xf]
    %v126 = vld [vmem:[#allocation7 + $0x68] sm:$0xf]
    %v127 = vld [vmem:[#allocation7 + $0x6c] sm:$0xf]
    %v128 = vld [vmem:[#allocation7 + $0x70] sm:$0xf]
    %v129 = vld [vmem:[#allocation7 + $0x74] sm:$0xf]
    %v130 = vld [vmem:[#allocation7 + $0x78] sm:$0xf]
    %v131 = vld [vmem:[#allocation7 + $0x7c] sm:$0xf]
    %v132 = vld [vmem:[#allocation7 + $0x80] sm:$0xf]
    %v133 = vld [vmem:[#allocation7 + $0x84] sm:$0xf]
    %v134 = vld [vmem:[#allocation7 + $0x88] sm:$0xf]
    %v135 = vld [vmem:[#allocation7 + $0x8c] sm:$0xf]
    %v136 = vld [vmem:[#allocation7 + $0x90] sm:$0xf]
    %v137 = vld [vmem:[#allocation7 + $0x94] sm:$0xf]
    %v138 = vld [vmem:[#allocation7 + $0x98] sm:$0xf]
    %v139 = vld [vmem:[#allocation7 + $0x9c] sm:$0xf]
    %v140 = vld [vmem:[#allocation7 + $0xa0] sm:$0xf]
    %v141 = vld [vmem:[#allocation7 + $0xa4] sm:$0xf]
    %v142 = vld [vmem:[#allocation7 + $0xa8] sm:$0xf]
    %v143 = vld [vmem:[#allocation7 + $0xac] sm:$0xf]
    %v144 = vld [vmem:[#allocation7 + $0xb0] sm:$0xf]
    %v145 = vld [vmem:[#allocation7 + $0xb4] sm:$0xf]
    %v146 = vld [vmem:[#allocation7 + $0xb8] sm:$0xf]
    %v147 = vld [vmem:[#allocation7 + $0xbc] sm:$0xf]
    %v152 = vunpack.c.l.b16 %v96
    %v153 = vunpack.c.h.b16 %v96
    %v154 = vunpack.c.l.b16 %v97
    %v155 = vunpack.c.l.b16 %v98
    %v156 = vunpack.c.h.b16 %v98
    %v157 = vunpack.c.l.b16 %v99
    %v158 = vpack.c.b16 %v155, %v152
    %v159 = vpack.c.b16 %v156, %v153
    %v160 = vpack.c.b16 %v157, %v154
    %v212 = vunpack.c.l.b16 %v100
    %v213 = vunpack.c.l.b16 %v101
    %v214 = vunpack.c.l.b16 %v102
    %v215 = vunpack.c.l.b16 %v103
    %v216 = vunpack.c.l.b16 %v104
    %v217 = vunpack.c.l.b16 %v105
    %v218 = vunpack.c.l.b16 %v106
    %v219 = vunpack.c.l.b16 %v107
    %v220 = vunpack.c.l.b16 %v108
    %v221 = vunpack.c.l.b16 %v109
    %v222 = vunpack.c.l.b16 %v110
    %v223 = vunpack.c.l.b16 %v111
    %v224 = vunpack.c.l.b16 %v112
    %v225 = vunpack.c.l.b16 %v113
    %v226 = vunpack.c.l.b16 %v114
    %v227 = vunpack.c.l.b16 %v115
    %v228 = vunpack.c.l.b16 %v116
    %v229 = vunpack.c.l.b16 %v117
    %v230 = vunpack.c.l.b16 %v118
    %v231 = vunpack.c.l.b16 %v119
    %v232 = vunpack.c.l.b16 %v120
    %v233 = vunpack.c.l.b16 %v121
    %v234 = vunpack.c.l.b16 %v122
    %v235 = vunpack.c.l.b16 %v123
    %v236 = vunpack.c.l.b16 %v124
    %v237 = vunpack.c.l.b16 %v125
    %v238 = vunpack.c.l.b16 %v126
    %v239 = vunpack.c.l.b16 %v127
    %v240 = vunpack.c.l.b16 %v128
    %v241 = vunpack.c.l.b16 %v129
    %v242 = vunpack.c.l.b16 %v130
    %v243 = vunpack.c.l.b16 %v131
    %v244 = vunpack.c.l.b16 %v132
    %v245 = vunpack.c.l.b16 %v133
    %v246 = vunpack.c.l.b16 %v134
    %v247 = vunpack.c.l.b16 %v135
    %v248 = vunpack.c.l.b16 %v136
    %v249 = vunpack.c.l.b16 %v137
    %v250 = vunpack.c.l.b16 %v138
    %v251 = vunpack.c.l.b16 %v139
    %v252 = vunpack.c.l.b16 %v140
    %v253 = vunpack.c.l.b16 %v141
    %v254 = vunpack.c.l.b16 %v142
    %v255 = vunpack.c.l.b16 %v143
    %v256 = vunpack.c.l.b16 %v144
    %v257 = vunpack.c.l.b16 %v145
    %v258 = vunpack.c.l.b16 %v146
    %v259 = vunpack.c.l.b16 %v147
    %v260 = vpack.c.b16 %v213, %v212
    %v261 = vpack.c.b16 %v215, %v214
    %v262 = vpack.c.b16 %v217, %v216
    %v263 = vpack.c.b16 %v219, %v218
    %v264 = vpack.c.b16 %v221, %v220
    %v265 = vpack.c.b16 %v223, %v222
    %v266 = vpack.c.b16 %v225, %v224
    %v267 = vpack.c.b16 %v227, %v226
    %v268 = vpack.c.b16 %v229, %v228
    %v269 = vpack.c.b16 %v231, %v230
    %v270 = vpack.c.b16 %v233, %v232
    %v271 = vpack.c.b16 %v235, %v234
    %v272 = vpack.c.b16 %v237, %v236
    %v273 = vpack.c.b16 %v239, %v238
    %v274 = vpack.c.b16 %v241, %v240
    %v275 = vpack.c.b16 %v243, %v242
    %v276 = vpack.c.b16 %v245, %v244
    %v277 = vpack.c.b16 %v247, %v246
    %v278 = vpack.c.b16 %v249, %v248
    %v279 = vpack.c.b16 %v251, %v250
    %v280 = vpack.c.b16 %v253, %v252
    %v281 = vpack.c.b16 %v255, %v254
    %v282 = vpack.c.b16 %v257, %v256
    %v283 = vpack.c.b16 %v259, %v258
    %308 = vmatprep.subr.bf16.mxu0 0
    %309 = vmatpush1.bf16.msra.mxu0 %v260
    %310 = vmatprep.subr.bf16.mxu0 0
    %311 = vmatpush1.bf16.msra.mxu0 %v261
    %312 = vmatprep.subr.bf16.mxu0 0
    %313 = vmatpush1.bf16.msra.mxu0 %v262
    %314 = vmatprep.subr.bf16.mxu0 0
    %315 = vmatpush1.bf16.msra.mxu0 %v263
    %316 = vmatprep.subr.bf16.mxu0 0
    %317 = vmatpush1.bf16.msra.mxu0 %v264
    %318 = vmatprep.subr.bf16.mxu0 0
    %319 = vmatpush1.bf16.msra.mxu0 %v265
    %320 = vmatprep.subr.bf16.mxu0 0
    %321 = vmatpush1.bf16.msra.mxu0 %v266
    %322 = vmatprep.subr.bf16.mxu0 0
    %323 = vmatpush1.bf16.msra.mxu0 %v267
    %324 = vmatprep.subr.bf16.mxu0 0
    %325 = vmatpush1.bf16.msra.mxu0 %v268
    %326 = vmatprep.subr.bf16.mxu0 0
    %327 = vmatpush1.bf16.msra.mxu0 %v269
    %328 = vmatprep.subr.bf16.mxu0 0
    %329 = vmatpush1.bf16.msra.mxu0 %v270
    %330 = vmatprep.subr.bf16.mxu0 0
    %331 = vmatpush1.bf16.msra.mxu0 %v271
    %332 = vmatprep.subr.bf16.mxu0 0
    %333 = vmatpush1.bf16.msra.mxu0 %v272
    %334 = vmatprep.subr.bf16.mxu0 0
    %335 = vmatpush1.bf16.msra.mxu0 %v273
    %336 = vmatprep.subr.bf16.mxu0 0
    %337 = vmatpush1.bf16.msra.mxu0 %v274
    %338 = vmatprep.subr.bf16.mxu0 0
    %339 = vmatpush1.bf16.msra.mxu0 %v275
    %340 = vmatprep.mubr.bf16.mxu0 %v159
    %341 = vmatmul.mubr.bf16.gmra.mrb[0].mxu0 %v158
    %v342 = vpop.f32.mrb[0].mxu0
    %v343 = vadd.f32 0.0, %v342
    %v344 = vpop.f32.mrb[0].mxu0
    %v345 = vpop.f32.mrb[0].mxu0
    %v346 = vadd.f32 0.0, %v345
    %v347 = vpop.f32.mrb[0].mxu0
    %348 = vdwg.mxu0
    %349 = vmatprep.subr.bf16.mxu0 0
    %350 = vmatpush1.bf16.msra.mxu0 %v276
    %351 = vmatprep.subr.bf16.mxu0 0
    %352 = vmatpush1.bf16.msra.mxu0 %v277
    %353 = vmatprep.subr.bf16.mxu0 0
    %354 = vmatpush1.bf16.msra.mxu0 %v278
    %355 = vmatprep.subr.bf16.mxu0 0
    %356 = vmatpush1.bf16.msra.mxu0 %v279
    %357 = vmatprep.subr.bf16.mxu0 0
    %358 = vmatpush1.bf16.msra.mxu0 %v280
    %359 = vmatprep.subr.bf16.mxu0 0
    %360 = vmatpush1.bf16.msra.mxu0 %v281
    %361 = vmatprep.subr.bf16.mxu0 0
    %362 = vmatpush1.bf16.msra.mxu0 %v282
    %363 = vmatprep.subr.bf16.mxu0 0
    %364 = vmatpush1.bf16.msra.mxu0 %v283
    %365 = vmatprep.subr.bf16.mxu0 0
    %366 = vmatpush1.bf16.msra.mxu0 0
    %367 = vmatprep.subr.bf16.mxu0 0
    %368 = vmatpush1.bf16.msra.mxu0 0
    %369 = vmatprep.subr.bf16.mxu0 0
    %370 = vmatpush1.bf16.msra.mxu0 0
    %371 = vmatprep.subr.bf16.mxu0 0
    %372 = vmatpush1.bf16.msra.mxu0 0
    %373 = vmatprep.subr.bf16.mxu0 0
    %374 = vmatpush1.bf16.msra.mxu0 0
    %375 = vmatprep.subr.bf16.mxu0 0
    %376 = vmatpush1.bf16.msra.mxu0 0
    %377 = vmatprep.subr.bf16.mxu0 0
    %378 = vmatpush1.bf16.msra.mxu0 0
    %379 = vmatprep.subr.bf16.mxu0 0
    %380 = vmatpush1.bf16.msra.mxu0 0
    %381 = vmatprep.mubr.bf16.mxu0 0
    %382 = vmatmul.mubr.bf16.gmra.mrb[0].mxu0 %v160
    %v383 = vpop.f32.mrb[0].mxu0
    %v384 = vadd.f32 %v343, %v383
    %v385 = vpop.f32.mrb[0].mxu0
    %v386 = vpop.f32.mrb[0].mxu0
    %v387 = vadd.f32 %v346, %v386
    %v388 = vpop.f32.mrb[0].mxu0
    %389 = vdwg.mxu0
    %v390 = vrot.slane %v384, 4
    %v391 = vmax.f32 %v384, %v390
    %v392 = vrot.slane %v391, 2
    %v393 = vmax.f32 %v391, %v392
    %v394 = vrot.slane %v393, 1
    %v395 = vmax.f32 %v393, %v394
    %v396 = vrot.slane %v387, 4
    %v397 = vmax.f32 %v387, %v396
    %v398 = vrot.slane %v397, 2
    %v399 = vmax.f32 %v397, %v398
    %v400 = vrot.slane %v399, 1
    %v401 = vmax.f32 %v399, %v400
    %v402 = vld [vmem:[%s2] sm:$0x1]
    %v404 = vlaneseq
    %v405 = vshrl.u32 %v404, 7
    %v406 = vsub.s32 0, %v405
    %v407 = vrot.slane %v402, %v406
    %v409 = vadd.f32 %v395, %v407
    %v410 = vadd.f32 %v401, %v407
    %v411 = vmax.f32 %v409, 0.0
    %v412 = vmax.f32 %v410, 0.0
    %v415 = vrot.slane %v412, 7
    %vm416 = vcmask 1041409
    %v417 = vsel %vm416, %v415, %v411
    %419 = vst [vmem:[#allocation9] sm:$0x3] %v417
    // Predicated region
    $region22: #{tpu_custom_call.1} parent=1 // pred_check
      _
    $region23: #{tpu_custom_call.1} parent=1 // pred_check_branch
      %421 = sbr.rel (0) target = $region25
    $region24: #{tpu_custom_call.1} parent=1 // pred_region
      %s423 = ssub.s32 32, 32
      %424 = vsyncadd [#allocation6], %s423
      %s426 = sshll.u32 [#allocation9], 4
      %s427 = int_to_ptr.vmem [resolvable:$true] %s426
      %429 = dma.vmem_to_hbm [thread:$0]  %s427, 32, %s3, [#allocation6]
    $region25: #{tpu_custom_call.1} parent=1 // pred_fallthru
      _
    // Predicated region
    $region26: #{tpu_custom_call.1} parent=1 // pred_check
      _
    $region27: #{tpu_custom_call.1} parent=1 // pred_check_branch
      %431 = sbr.rel (0) target = $region29
    $region28: #{tpu_custom_call.1} parent=1 // pred_region
      %432 = dma.done [#allocation6], 32
    $region29: #{tpu_custom_call.1} parent=1 // pred_fallthru
      _
    %433 = vsyncpa [#allocation5], 1
    %434 = vsyncpa [#allocation8], 1
    %435 = vsyncpa [#allocation6], 1

</llo_original>
